<compile_context>
chip_gen: v6e
topology: v6e:2x2x1
jax: 0.10.0
libtpu: 0.0.40
codegen_flags: <defaults>
</compile_context>

<pallas_src>
import functools
import math

import numpy as np

import jax
import jax.numpy as jnp
from jax.experimental import pallas as pl
from jax.experimental.pallas import tpu as pltpu

_VMEM_LIMIT = 32 * 1024 * 1024      # keep <= 32 MiB so v7x (64 MiB VMEM) is safe


def _full_spec(shape):
    zeros = (0,) * len(shape)
    return pl.BlockSpec(shape, lambda *_: zeros)


def _gelu(x):
    # TODO(synk): PyTorch nn.GELU() is exact erf-GELU; tanh approximation used here.
    return jax.nn.gelu(x, approximate=True)


def position_encoding(pos, base, levels):
    # TODO(synk): PositionEncoding class not given; NeRV convention assumed:
    #   pe(t) = concat(sin(base^i * pi * t), cos(base^i * pi * t)), length 2*levels.
    freqs = (base ** jnp.arange(levels, dtype=jnp.float32)) * math.pi
    v = pos * freqs[None, :]
    return jnp.concatenate([jnp.sin(v), jnp.cos(v)], axis=-1)


# --------------------------- in-kernel helpers --------------------------------

def _im2col_3x3(x, H, W):
    """x: (H*W, Cpad) f32 -> (H*W, 9*Cpad) bf16 (zero padded borders).

    Cpad is a multiple of 128, so the lane concatenation is tile-aligned."""
    HW = H * W
    rows = jax.lax.broadcasted_iota(jnp.int32, (HW, 1), 0)
    rr = rows // W
    cc = rows % W
    taps = []
    for di in (-1, 0, 1):
        for dj in (-1, 0, 1):
            s = di * W + dj
            shifted = pltpu.roll(x, (-s) % HW, axis=0) if s % HW != 0 else x
            valid = ((rr + di >= 0) & (rr + di <= H - 1) &
                     (cc + dj >= 0) & (cc + dj <= W - 1))
            taps.append(jnp.where(valid, shifted, 0.0).astype(jnp.bfloat16))
    return jnp.concatenate(taps, axis=-1)


# ----------------- one-time kernel: stem_xy + trans1 (xy path) ----------------

def _xy_kernel(pe_ref, wxy_ref, bxy_ref, wq_ref, wk_ref, wv_ref,
               wf1_ref, bf1_ref, wf2_ref, bf2_ref, o_ref, *, dim_head):
    f32, bf16 = jnp.float32, jnp.bfloat16
    xy = _gelu(jnp.dot(pe_ref[...].astype(bf16), wxy_ref[...],
                       preferred_element_type=f32) + bxy_ref[...])        # (HW, 64)
    xb = xy.astype(bf16)
    q = jnp.dot(xb, wq_ref[...], preferred_element_type=f32)
    k = jnp.dot(xb, wk_ref[...], preferred_element_type=f32)
    v = jnp.dot(xb, wv_ref[...], preferred_element_type=f32)
    s = jax.lax.dot_general(q.astype(bf16), k.astype(bf16),
                            (((1,), (1,)), ((), ())),
                            preferred_element_type=f32) * (dim_head ** (-0.5))
    m = jnp.max(s, axis=-1, keepdims=True)
    p = jnp.exp(s - m)
    o = jnp.dot(p.astype(bf16), v.astype(bf16), preferred_element_type=f32)
    o = o * pl.reciprocal(jnp.sum(p, axis=-1, keepdims=True), approx=False)
    x = xy + o                                                           # out-proj = Identity (heads=1)
    h = _gelu(jnp.dot(x.astype(bf16), wf1_ref[...],
                      preferred_element_type=f32) + bf1_ref[...])
    x = x + jnp.dot(h.astype(bf16), wf2_ref[...],
                    preferred_element_type=f32) + bf2_ref[...]
    o_ref[...] = x.astype(o_ref.dtype)


def xy_precompute_call(inputs):
    hw = inputs[0].shape[0]
    return pl.pallas_call(
        functools.partial(_xy_kernel, dim_head=64),
        out_shape=jax.ShapeDtypeStruct((hw, 64), jnp.float32),
        grid=(1,),
        in_specs=[_full_spec(a.shape) for a in inputs],
        out_specs=_full_spec((hw, 64)),
        compiler_params=pltpu.CompilerParams(
            dimension_semantics=("arbitrary",), vmem_limit_bytes=_VMEM_LIMIT),
    )(*inputs)


# --------------------------- per-frame stem kernel -----------------------------

def _stem_kernel(pe_ref, w1_ref, b1_ref, wbd_ref, bbd_ref, wtl_ref, btl_ref, o_ref):
    # TODO(synk): NeRV_MLP structure not given; Linear + act after every layer assumed.
    f32, bf16 = jnp.float32, jnp.bfloat16
    h = _gelu(jnp.dot(pe_ref[...].astype(bf16), w1_ref[...],
                      preferred_element_type=f32) + b1_ref[...])          # (B, 256)
    # block-diagonal merge of stem_t[1] and t_branch[1] -> one matmul
    s2 = _gelu(jnp.dot(h.astype(bf16), wbd_ref[...],
                       preferred_element_type=f32) + bbd_ref[...])        # (B, 256)
    t_feat = _gelu(jnp.dot(s2[:, 128:256].astype(bf16), wtl_ref[...],
                           preferred_element_type=f32) + btl_ref[...])    # (B, 768)
    o_ref[...] = jnp.concatenate([s2[:, 0:128], t_feat], axis=-1).astype(o_ref.dtype)


def stem_call(sp, pe_t):
    B = pe_t.shape[0]
    inputs = [pe_t.astype(jnp.float32), sp["w1"], sp["b1"], sp["wbd"], sp["bbd"],
              sp["wtl"], sp["btl"]]
    return pl.pallas_call(
        _stem_kernel,
        out_shape=jax.ShapeDtypeStruct((B, 896), jnp.float32),
        grid=(1,),
        in_specs=[_full_spec(a.shape) for a in inputs],
        out_specs=_full_spec((B, 896)),
        compiler_params=pltpu.CompilerParams(
            dimension_semantics=("arbitrary",), vmem_limit_bytes=_VMEM_LIMIT),
    )(*inputs)


# ------------- fused post-stem mega kernel (trans2 + decoder + head) ----------

def _mega_kernel(stem_ref, xy1_ref, wqkv_ref, wo_ref, bo_ref,
                 wf1_ref, bf1_ref, wf2_ref, bf2_ref,
                 wc1_ref, bc1_ref, p0_ref, wc2_ref, bc2_ref,
                 wd1_ref, bd1_ref, p1_ref, wh_ref, bh_ref,
                 out0_ref, out1_ref, img_ref,
                 *, heads, dim_head, dh_pad, fc_h, fc_w, eps=1e-5):
    f32, bf16 = jnp.float32, jnp.bfloat16
    trow = stem_ref[0]                                     # (1, 896)
    t_emb = trow[:, 0:64]
    g0, b0f = trow[:, 128:192], trow[:, 256:320]
    g1, b1f = trow[:, 384:640], trow[:, 640:896]

    # ---- trans2: x = xy1 * t_emb; attn + residual; FFN + residual ----
    x = xy1_ref[...] * t_emb                               # (16, 64) f32
    qkv = jnp.dot(x.astype(bf16), wqkv_ref[...], preferred_element_type=f32)
    inner = heads * dh_pad
    scale = dim_head ** (-0.5)
    head_outs = []
    for h in range(heads):                                 # per-head softmax only
        q = qkv[:, h * dh_pad:(h + 1) * dh_pad]
        k = qkv[:, inner + h * dh_pad: inner + (h + 1) * dh_pad]
        v = qkv[:, 2 * inner + h * dh_pad: 2 * inner + (h + 1) * dh_pad]
        s = jax.lax.dot_general(q.astype(bf16), k.astype(bf16),
                                (((1,), (1,)), ((), ())),
                                preferred_element_type=f32) * scale
        m = jnp.max(s, axis=-1, keepdims=True)
        p = jnp.exp(s - m)
        o = jnp.dot(p.astype(bf16), v.astype(bf16), preferred_element_type=f32)
        o = o * pl.reciprocal(jnp.sum(p, axis=-1, keepdims=True), approx=False)
        head_outs.append(o.astype(bf16))
    o_cat = jnp.concatenate(head_outs, axis=-1)            # 128-aligned pieces
    attn = jnp.dot(o_cat, wo_ref[...], preferred_element_type=f32) + bo_ref[...]
    x = x + attn
    hdn = _gelu(jnp.dot(x.astype(bf16), wf1_ref[...],
                        preferred_element_type=f32) + bf1_ref[...])
    x = x + jnp.dot(hdn.astype(bf16), wf2_ref[...],
                    preferred_element_type=f32) + bf2_ref[...]
    # x == emb (16, 64); toconv == Identity (block_dim == fc_dim)

    def inorm_film(z, gamma, beta):
        # nn.InstanceNorm2d(affine=False): per-channel stats over spatial axis.
        mean = jnp.mean(z, axis=0, keepdims=True)
        var = jnp.mean(jnp.square(z - mean), axis=0, keepdims=True)
        return (z - mean) * jax.lax.rsqrt(var + eps) * gamma + beta

    H0, W0 = 2 * fc_h, 2 * fc_w                            # 8 x 8

    # ---- stage 0 (Conv_Up_Block): 1x1 conv -> pixel shuffle -> 3x3 conv -> gelu ----
    z = inorm_film(x, g0, b0f)                             # (16, 64)
    c1 = jnp.dot(z.astype(bf16), wc1_ref[...],
                 preferred_element_type=f32) + bc1_ref[...]               # (16, 512)
    y0 = None
    for ij in range(4):                                    # pixel shuffle as 4 permutation matmuls
        contrib = jnp.dot(p0_ref[ij], c1[:, ij * 128:(ij + 1) * 128].astype(bf16),
                          preferred_element_type=f32)
        y0 = contrib if y0 is None else y0 + contrib       # (64, 128)
    im0 = _im2col_3x3(y0, H0, W0)                          # (64, 1152) bf16
    o0 = _gelu(jnp.dot(im0, wc2_ref[...], preferred_element_type=f32) + bc2_ref[...])
    out0_ref[0] = o0.astype(out0_ref.dtype)                # (64, 256), real 192

    # ---- stage 1 (NeRVBlock dec): 3x3 conv -> pixel shuffle -> gelu ----
    # TODO(synk): NeRVBlock(dec_block=True) not given; UpConv(pshuffel)->norm('none')->gelu assumed.
    z1 = inorm_film(o0, g1, b1f)                           # (64, 256)
    im1 = _im2col_3x3(z1, H0, W0)                          # (64, 2304) bf16
    d1 = _gelu(jnp.dot(im1, wd1_ref[...], preferred_element_type=f32) + bd1_ref[...])
    y1 = None
    for ij in range(4):                                    # gelu commutes with the shuffle permutation
        contrib = jnp.dot(p1_ref[ij], d1[:, ij * 128:(ij + 1) * 128].astype(bf16),
                          preferred_element_type=f32)
        y1 = contrib if y1 is None else y1 + contrib       # (256, 128), real 96
    out1_ref[0] = y1.astype(out1_ref.dtype)

    # ---- head 1x1 conv + OutImg(out_bias='tanh') ----
    hi = jnp.dot(y1.astype(bf16), wh_ref[...], preferred_element_type=f32) + bh_ref[...]
    img_ref[0] = (jnp.tanh(hi) * 0.5 + 0.5).astype(img_ref.dtype)


def mega_call(mp, stem3, xy1, *, fc_h, fc_w):
    B = stem3.shape[0]
    HW0 = (2 * fc_h) * (2 * fc_w)
    HW1 = (4 * fc_h) * (4 * fc_w)
    inputs = [stem3, xy1, mp["wqkv"], mp["wo"], mp["bo"], mp["wf1"], mp["bf1"],
              mp["wf2"], mp["bf2"], mp["wc1"], mp["bc1"], mp["p0"], mp["wc2"],
              mp["bc2"], mp["wd1"], mp["bd1"], mp["p1"], mp["wh"], mp["bh"]]
    in_specs = ([pl.BlockSpec((1, 1, stem3.shape[-1]), lambda b: (b, 0, 0))]
                + [_full_spec(a.shape) for a in inputs[1:]])
    out_shape = (jax.ShapeDtypeStruct((B, HW0, 256), jnp.float32),
                 jax.ShapeDtypeStruct((B, HW1, 128), jnp.float32),
                 jax.ShapeDtypeStruct((B, HW1, 128), jnp.float32))
    out_specs = (pl.BlockSpec((1, HW0, 256), lambda b: (b, 0, 0)),
                 pl.BlockSpec((1, HW1, 128), lambda b: (b, 0, 0)),
                 pl.BlockSpec((1, HW1, 128), lambda b: (b, 0, 0)))
    kern = functools.partial(_mega_kernel, heads=8, dim_head=64, dh_pad=128,
                             fc_h=fc_h, fc_w=fc_w)
    return pl.pallas_call(
        kern, out_shape=out_shape, grid=(B,), in_specs=in_specs, out_specs=out_specs,
        compiler_params=pltpu.CompilerParams(
            dimension_semantics=("parallel",),       # 2 TCs on v7x; ~no-op on v5e/v6e
            vmem_limit_bytes=_VMEM_LIMIT),
    )(*inputs)


# ----------------------------- configuration ---------------------------------

CFG = dict(
    embed_base=1.25, lfreq=8,        # pe embed_length = 16
    fc_h=4, fc_w=4,
    fc_dim=64, block_dim=64,         # equal -> toconv == Identity
    mlp_dim=32,                      # block_dim // 2
    dec_strds=(2, 2), dec_blks=(1, 1),
    reduce=2, lower_width=12, expansion=3,
    ks_dec1=1, ks_dec2=5,
)


def _linear_params(key, din, dout, bias=True):
    kw, kb = jax.random.split(key)
    return {"w": jax.random.normal(kw, (din, dout), jnp.float32) * 0.02,
            "b": jax.random.normal(kb, (dout,), jnp.float32) * 0.02 if bias else None}


def _conv_params(key, cin, cout, k, bias=True):
    kw, kb = jax.random.split(key)
    return {"w": jax.random.normal(kw, (cout, cin, k, k), jnp.float32) * 0.02,
            "b": jax.random.normal(kb, (cout,), jnp.float32) * 0.02 if bias else None}


def init_params(key, cfg):
    L = cfg["lfreq"]
    pe_len = 2 * L
    bd = cfg["block_dim"]
    keys = iter(jax.random.split(key, 64))
    params = {}
    params["stem_t"] = [_linear_params(next(keys), pe_len, 2 * bd),
                        _linear_params(next(keys), 2 * bd, bd)]
    params["t_branch"] = [_linear_params(next(keys), pe_len, 128),
                          _linear_params(next(keys), 128, 128)]
    params["stem_xy"] = [_linear_params(next(keys), 2 * pe_len, bd)]

    def trans_params(heads, dim_head, project_out):
        inner = heads * dim_head
        return {
            "qkv_w": jax.random.normal(next(keys), (bd, 3 * inner), jnp.float32) * 0.02,
            "out": _linear_params(next(keys), inner, bd) if project_out else None,
            "ff1": _linear_params(next(keys), bd, cfg["mlp_dim"]),
            "ff2": _linear_params(next(keys), cfg["mlp_dim"], bd),
        }

    params["trans1"] = trans_params(1, 64, project_out=False)
    params["trans2"] = trans_params(8, 64, project_out=True)

    ngf = cfg["fc_dim"]
    t_layers, layers = [], []
    for i, strd in enumerate(cfg["dec_strds"]):
        if i == 0:
            new_ngf = int(ngf * cfg["expansion"])
        else:
            new_ngf = int(max(ngf // (1 if strd == 1 else cfg["reduce"]),
                              cfg["lower_width"]))
        for j in range(cfg["dec_blks"][i]):
            ks = min(cfg["ks_dec1"] + 2 * i, cfg["ks_dec2"])
            stride = 1 if j else strd
            t_layers.append([_linear_params(next(keys), 128, 2 * ngf)])
            if i == 0:
                layers.append({
                    "type": "conv_up", "stride": stride, "ngf": ngf, "ks": ks,
                    "conv1": _conv_params(next(keys), ngf, (ngf // 4) * stride * stride, ks),
                    "conv2": _conv_params(next(keys), ngf // 4, new_ngf, 3),
                })
            else:
                layers.append({
                    "type": "nerv", "stride": stride, "ngf": ngf, "ks": ks,
                    "conv": _conv_params(next(keys), ngf, new_ngf * stride * stride, ks),
                })
            ngf = new_ngf
    params["t_layers"] = t_layers
    params["layers"] = layers
    params["head"] = _conv_params(next(keys), ngf, 3, 1)
    return params


# ------------------------ one-time parameter preparation ----------------------

def make_shuffle_mats(H, W, r):
    """P[i*r+j] @ x_ij places the (i, j) sub-image into the (H*r, W*r) flat output."""
    HW, HWr = H * W, H * r * W * r
    mats = np.zeros((r * r, HWr, HW), np.float32)
    for i in range(r):
        for j in range(r):
            for h in range(H):
                for w in range(W):
                    mats[i * r + j, (h * r + i) * (W * r) + (w * r + j), h * W + w] = 1.0
    return mats


def prepare_params(params, cfg):
    """Host-side weight re-layout + hoisted xy path.  Runs once, not per frame."""
    assert cfg["fc_dim"] == cfg["block_dim"] == 64
    assert cfg["dec_strds"] == (2, 2) and cfg["dec_blks"] == (1, 1)
    bf16 = jnp.bfloat16
    fc_h, fc_w = cfg["fc_h"], cfg["fc_w"]
    base, L = cfg["embed_base"], cfg["lfreq"]
    mlp = cfg["mlp_dim"]
    prep = {}

    # ---- stem: merged first layer, block-diag second layer, padded FiLM layout ----
    st1, st2 = params["stem_t"]
    tb1, tb2 = params["t_branch"]
    w1c = jnp.concatenate([st1["w"], tb1["w"]], axis=1)                  # (16, 256)
    b1c = jnp.concatenate([st1["b"], tb1["b"]])[None]
    wbd = jnp.zeros((256, 256), jnp.float32)
    wbd = wbd.at[:128, 0:64].set(st2["w"]).at[128:, 128:].set(tb2["w"])
    bbd = jnp.zeros((256,), jnp.float32).at[0:64].set(st2["b"]).at[128:].set(tb2["b"])
    tl0, tl1 = params["t_layers"][0][0], params["t_layers"][1][0]
    # output layout (768 wide, all groups 128-aligned): [g0|pad|b0|pad|g1(192+pad)|b1(192+pad)]
    wtl = jnp.zeros((128, 768), jnp.float32)
    wtl = wtl.at[:, 0:64].set(tl0["w"][:, 0:64])
    wtl = wtl.at[:, 128:192].set(tl0["w"][:, 64:128])
    wtl = wtl.at[:, 256:448].set(tl1["w"][:, 0:192])
    wtl = wtl.at[:, 512:704].set(tl1["w"][:, 192:384])
    btl = jnp.zeros((768,), jnp.float32)
    btl = btl.at[0:64].set(tl0["b"][0:64]).at[128:192].set(tl0["b"][64:128])
    btl = btl.at[256:448].set(tl1["b"][0:192]).at[512:704].set(tl1["b"][192:384])
    prep["stem"] = dict(w1=w1c.astype(bf16), b1=b1c, wbd=wbd.astype(bf16),
                        bbd=bbd[None], wtl=wtl.astype(bf16), btl=btl[None])

    # ---- trans2: per-head padded QKV (each head gets a 128-wide aligned block) ----
    heads, dh = 8, 64
    qkv = params["trans2"]["qkv_w"]                                      # (64, 1536)
    wqkv = jnp.zeros((64, 3 * heads * 128), jnp.float32)
    for part in range(3):
        for h in range(heads):
            src = qkv[:, part * heads * dh + h * dh: part * heads * dh + (h + 1) * dh]
            dst = part * heads * 128 + h * 128
            wqkv = wqkv.at[:, dst:dst + dh].set(src)
    wo = params["trans2"]["out"]["w"]                                    # (512, 64)
    wo_pad = jnp.zeros((heads * 128, 64), jnp.float32)
    for h in range(heads):
        wo_pad = wo_pad.at[h * 128:h * 128 + dh, :].set(wo[h * dh:(h + 1) * dh, :])
    wf1 = jnp.zeros((64, 128), jnp.float32).at[:, :mlp].set(params["trans2"]["ff1"]["w"])
    bf1 = jnp.zeros((128,), jnp.float32).at[:mlp].set(params["trans2"]["ff1"]["b"])
    wf2 = jnp.zeros((128, 64), jnp.float32).at[:mlp, :].set(params["trans2"]["ff2"]["w"])
    bf2 = params["trans2"]["ff2"]["b"]

    # ---- decoder weights (reordered / padded for the fused kernel) ----
    lay0, lay1 = params["layers"]
    assert lay0["ks"] == 1 and lay1["ks"] == 3
    r = 2
    # stage-0 conv1 (1x1, 64 -> 4*16), output columns grouped (i, j, c) padded to 128/group
    w_np, b_np = np.asarray(lay0["conv1"]["w"]), np.asarray(lay0["conv1"]["b"])
    C0 = w_np.shape[0] // (r * r)
    wc1 = np.zeros((64, r * r * 128), np.float32)
    bc1 = np.zeros((r * r * 128,), np.float32)
    for c in range(C0):
        for i in range(r):
            for j in range(r):
                o = c * r * r + i * r + j
                col = (i * r + j) * 128 + c
                wc1[:, col] = w_np[o, :, 0, 0]
                bc1[col] = b_np[o]
    # stage-0 conv2 (3x3, 16 -> 192): rows (tap, cin padded 128), cols padded to 256
    w_np, b_np = np.asarray(lay0["conv2"]["w"]), np.asarray(lay0["conv2"]["b"])
    cin0, cout0 = w_np.shape[1], w_np.shape[0]
    wc2 = np.zeros((9 * 128, 256), np.float32)
    for ki in range(3):
        for kj in range(3):
            wc2[(ki * 3 + kj) * 128:(ki * 3 + kj) * 128 + cin0, :cout0] = w_np[:, :, ki, kj].T
    bc2 = np.zeros((256,), np.float32)
    bc2[:cout0] = b_np
    # stage-1 conv (3x3, 192 -> 4*96): rows (tap, cin padded 256), cols (i, j, c) padded to 128/group
    w_np, b_np = np.asarray(lay1["conv"]["w"]), np.asarray(lay1["conv"]["b"])
    cin1, cout1 = w_np.shape[1], w_np.shape[0]
    C1 = cout1 // (r * r)
    colmap = np.zeros((cout1,), np.int64)
    for c in range(C1):
        for i in range(r):
            for j in range(r):
                colmap[c * r * r + i * r + j] = (i * r + j) * 128 + c
    wd1 = np.zeros((9 * 256, r * r * 128), np.float32)
    for ki in range(3):
        for kj in range(3):
            blk = np.zeros((256, r * r * 128), np.float32)
            blk[:cin1, colmap] = w_np[:, :, ki, kj].T
            wd1[(ki * 3 + kj) * 256:(ki * 3 + kj + 1) * 256] = blk
    bd1 = np.zeros((r * r * 128,), np.float32)
    bd1[colmap] = b_np
    # head 1x1 conv (96 -> 3), padded to 128 x 128 (lane-dense output)
    w_np, b_np = np.asarray(params["head"]["w"]), np.asarray(params["head"]["b"])
    wh = np.zeros((128, 128), np.float32)
    wh[:w_np.shape[1], :w_np.shape[0]] = w_np[:, :, 0, 0].T
    bh = np.zeros((128,), np.float32)
    bh[:w_np.shape[0]] = b_np
    p0 = make_shuffle_mats(fc_h, fc_w, r)
    p1 = make_shuffle_mats(2 * fc_h, 2 * fc_w, r)

    prep["mega"] = dict(
        wqkv=wqkv.astype(bf16), wo=wo_pad.astype(bf16),
        bo=params["trans2"]["out"]["b"][None],
        wf1=wf1.astype(bf16), bf1=bf1[None], wf2=wf2.astype(bf16), bf2=bf2[None],
        wc1=jnp.asarray(wc1, bf16), bc1=jnp.asarray(bc1)[None],
        p0=jnp.asarray(p0, bf16),
        wc2=jnp.asarray(wc2, bf16), bc2=jnp.asarray(bc2)[None],
        wd1=jnp.asarray(wd1, bf16), bd1=jnp.asarray(bd1)[None],
        p1=jnp.asarray(p1, bf16),
        wh=jnp.asarray(wh, bf16), bh=jnp.asarray(bh)[None])

    # ---- hoisted xy path: pe_xy -> stem_xy -> trans1 (frame independent) ----
    xs = np.arange(fc_h, dtype=np.float32) / fc_h
    ys = np.arange(fc_w, dtype=np.float32) / fc_w
    grid = np.stack(np.meshgrid(xs, ys, indexing="ij"), axis=0).reshape(2, fc_h * fc_w)
    pe_x = position_encoding(jnp.asarray(grid[0])[:, None], base, L)
    pe_y = position_encoding(jnp.asarray(grid[1])[:, None], base, L)
    pe_xy = jnp.concatenate([pe_x, pe_y], axis=1)                        # (16, 32)
    xyp = params["stem_xy"][0]
    t1 = params["trans1"]
    wf1a = jnp.zeros((64, 128), jnp.float32).at[:, :mlp].set(t1["ff1"]["w"])
    bf1a = jnp.zeros((128,), jnp.float32).at[:mlp].set(t1["ff1"]["b"])
    wf2a = jnp.zeros((128, 64), jnp.float32).at[:mlp, :].set(t1["ff2"]["w"])
    xy_inputs = [pe_xy.astype(jnp.float32), xyp["w"].astype(bf16), xyp["b"][None],
                 t1["qkv_w"][:, 0:64].astype(bf16), t1["qkv_w"][:, 64:128].astype(bf16),
                 t1["qkv_w"][:, 128:192].astype(bf16),
                 wf1a.astype(bf16), bf1a[None], wf2a.astype(bf16), t1["ff2"]["b"][None]]
    prep["xy1"] = xy_precompute_call(xy_inputs)                          # (16, 64)
    return prep


# ------------------------------ ENeRV forward ---------------------------------

def enerv_forward(prep, cfg, t_input):
    B = t_input.shape[0]
    pe_t = position_encoding(t_input[:, None].astype(jnp.float32),
                             cfg["embed_base"], cfg["lfreq"])            # (B, 16)
    stem_out = stem_call(prep["stem"], pe_t)                             # (B, 896)
    out0p, out1p, imgp = mega_call(prep["mega"], stem_out[:, None, :], prep["xy1"],
                                   fc_h=cfg["fc_h"], fc_w=cfg["fc_w"])
    H0, W0 = 2 * cfg["fc_h"], 2 * cfg["fc_w"]
    H1, W1 = 2 * H0, 2 * W0
    c0 = cfg["fc_dim"] * cfg["expansion"]                                # 192
    c1 = max(c0 // cfg["reduce"], cfg["lower_width"])                    # 96
    out0 = out0p[:, :, :c0].reshape(B, H0, W0, c0).transpose(0, 3, 1, 2)
    out1 = out1p[:, :, :c1].reshape(B, H1, W1, c1).transpose(0, 3, 1, 2)
    img = imgp[:, :, :3].reshape(B, H1, W1, 3).transpose(0, 3, 1, 2)
    # TODO(synk): dec_time / torch.cuda.synchronize of the reference has no kernel equivalent.
    return img, [out0, out1]


# ---------------------------------- main --------------------------------------

if __name__ == "__main__":
    key = jax.random.PRNGKey(0)
    pkey, ikey = jax.random.split(key)
    params = init_params(pkey, CFG)
    prep = prepare_params(params, CFG)       # one-time (includes hoisted xy / trans1 kernel)

    batch = 2
    t_input = jax.random.uniform(ikey, (batch,), jnp.float32)   # normalized frame idx

    fwd = jax.jit(functools.partial(enerv_forward, prep, CFG))
    img, out_list = fwd(t_input)
    img = jax.block_until_ready(img)
    for o in out_list:
        jax.block_until_ready(o)

    assert img.shape == (batch, 3, 16, 16), img.shape
    assert out_list[0].shape == (batch, 192, 8, 8), out_list[0].shape
    assert out_list[1].shape == (batch, 96, 16, 16), out_list[1].shape
    assert bool(jnp.all(jnp.isfinite(img)))
    assert bool(jnp.all(jnp.isfinite(out_list[0]))) and bool(jnp.all(jnp.isfinite(out_list[1])))
    print("KERNEL_OK")
</pallas_src>

<mosaic_0001>
module attributes {stable_mosaic.version = 11 : i64} {
  func.func @_xy_kernel(%arg0: i32, %arg1: memref<16x32xf32, #tpu.memory_space<vmem>>, %arg2: memref<32x64xbf16, #tpu.memory_space<vmem>>, %arg3: memref<1x64xf32, #tpu.memory_space<vmem>>, %arg4: memref<64x64xbf16, #tpu.memory_space<vmem>>, %arg5: memref<64x64xbf16, #tpu.memory_space<vmem>>, %arg6: memref<64x64xbf16, #tpu.memory_space<vmem>>, %arg7: memref<64x128xbf16, #tpu.memory_space<vmem>>, %arg8: memref<1x128xf32, #tpu.memory_space<vmem>>, %arg9: memref<128x64xbf16, #tpu.memory_space<vmem>>, %arg10: memref<1x64xf32, #tpu.memory_space<vmem>>, %arg11: memref<16x64xf32, #tpu.memory_space<vmem>>) attributes {dimension_semantics = [#tpu.dimension_semantics<arbitrary>], iteration_bounds = array<i64: 1>, scalar_prefetch = 0 : i64, scratch_operands = 0 : i64, tpu.core_type = #tpu.core_type<tc>, window_params = [{pipeline_mode = #tpu.pipeline_mode<synchronous>, transform_indices = @transform_0, window_bounds = array<i64: 16, 32>}, {pipeline_mode = #tpu.pipeline_mode<synchronous>, transform_indices = @transform_1, window_bounds = array<i64: 32, 64>}, {pipeline_mode = #tpu.pipeline_mode<synchronous>, transform_indices = @transform_2, window_bounds = array<i64: 1, 64>}, {pipeline_mode = #tpu.pipeline_mode<synchronous>, transform_indices = @transform_3, window_bounds = array<i64: 64, 64>}, {pipeline_mode = #tpu.pipeline_mode<synchronous>, transform_indices = @transform_4, window_bounds = array<i64: 64, 64>}, {pipeline_mode = #tpu.pipeline_mode<synchronous>, transform_indices = @transform_5, window_bounds = array<i64: 64, 64>}, {pipeline_mode = #tpu.pipeline_mode<synchronous>, transform_indices = @transform_6, window_bounds = array<i64: 64, 128>}, {pipeline_mode = #tpu.pipeline_mode<synchronous>, transform_indices = @transform_7, window_bounds = array<i64: 1, 128>}, {pipeline_mode = #tpu.pipeline_mode<synchronous>, transform_indices = @transform_8, window_bounds = array<i64: 128, 64>}, {pipeline_mode = #tpu.pipeline_mode<synchronous>, transform_indices = @transform_9, window_bounds = array<i64: 1, 64>}, {pipeline_mode = #tpu.pipeline_mode<synchronous>, transform_indices = @transform_10, window_bounds = array<i64: 16, 64>}]} {
    %c0 = arith.constant 0 : index
    %c0_0 = arith.constant 0 : index
    %0 = vector.load %arg1[%c0, %c0_0] : memref<16x32xf32, #tpu.memory_space<vmem>>, vector<16x32xf32>
    %1 = arith.truncf %0 : vector<16x32xf32> to vector<16x32xbf16>
    %c0_1 = arith.constant 0 : index
    %c0_2 = arith.constant 0 : index
    %2 = vector.load %arg2[%c0_1, %c0_2] : memref<32x64xbf16, #tpu.memory_space<vmem>>, vector<32x64xbf16>
    %cst = arith.constant dense<0.000000e+00> : vector<16x64xf32>
    %3 = tpu.matmul %1, %2, %cst {dimension_numbers = #tpu.dot_dimension_numbers<[1], [0], [0], [1], [0, 0, 1, 1], [], []>} : vector<16x32xbf16>, vector<32x64xbf16>, vector<16x64xf32> -> vector<16x64xf32>
    %c0_3 = arith.constant 0 : index
    %c0_4 = arith.constant 0 : index
    %4 = vector.load %arg3[%c0_3, %c0_4] : memref<1x64xf32, #tpu.memory_space<vmem>>, vector<1x64xf32>
    %5 = vector.broadcast %4 : vector<1x64xf32> to vector<16x64xf32>
    %6 = arith.addf %3, %5 : vector<16x64xf32>
    %7 = arith.mulf %6, %6 : vector<16x64xf32>
    %8 = arith.mulf %6, %7 : vector<16x64xf32>
    %cst_5 = arith.constant 4.471500e-02 : f32
    %9 = vector.broadcast %cst_5 : f32 to vector<16x64xf32>
    %10 = arith.mulf %9, %8 : vector<16x64xf32>
    %11 = arith.addf %6, %10 : vector<16x64xf32>
    %cst_6 = arith.constant 0.797884583 : f32
    %12 = vector.broadcast %cst_6 : f32 to vector<16x64xf32>
    %13 = arith.mulf %12, %11 : vector<16x64xf32>
    %14 = math.tanh %13 : vector<16x64xf32>
    %cst_7 = arith.constant 1.000000e+00 : f32
    %15 = vector.broadcast %cst_7 : f32 to vector<16x64xf32>
    %16 = arith.addf %15, %14 : vector<16x64xf32>
    %cst_8 = arith.constant 5.000000e-01 : f32
    %17 = vector.broadcast %cst_8 : f32 to vector<16x64xf32>
    %18 = arith.mulf %17, %16 : vector<16x64xf32>
    %19 = arith.mulf %6, %18 : vector<16x64xf32>
    %20 = arith.truncf %19 : vector<16x64xf32> to vector<16x64xbf16>
    %c0_9 = arith.constant 0 : index
    %c0_10 = arith.constant 0 : index
    %21 = vector.load %arg4[%c0_9, %c0_10] : memref<64x64xbf16, #tpu.memory_space<vmem>>, vector<64x64xbf16>
    %cst_11 = arith.constant dense<0.000000e+00> : vector<16x64xf32>
    %22 = tpu.matmul %20, %21, %cst_11 {dimension_numbers = #tpu.dot_dimension_numbers<[1], [0], [0], [1], [0, 0, 1, 1], [], []>} : vector<16x64xbf16>, vector<64x64xbf16>, vector<16x64xf32> -> vector<16x64xf32>
    %c0_12 = arith.constant 0 : index
    %c0_13 = arith.constant 0 : index
    %23 = vector.load %arg5[%c0_12, %c0_13] : memref<64x64xbf16, #tpu.memory_space<vmem>>, vector<64x64xbf16>
    %cst_14 = arith.constant dense<0.000000e+00> : vector<16x64xf32>
    %24 = tpu.matmul %20, %23, %cst_14 {dimension_numbers = #tpu.dot_dimension_numbers<[1], [0], [0], [1], [0, 0, 1, 1], [], []>} : vector<16x64xbf16>, vector<64x64xbf16>, vector<16x64xf32> -> vector<16x64xf32>
    %c0_15 = arith.constant 0 : index
    %c0_16 = arith.constant 0 : index
    %25 = vector.load %arg6[%c0_15, %c0_16] : memref<64x64xbf16, #tpu.memory_space<vmem>>, vector<64x64xbf16>
    %cst_17 = arith.constant dense<0.000000e+00> : vector<16x64xf32>
    %26 = tpu.matmul %20, %25, %cst_17 {dimension_numbers = #tpu.dot_dimension_numbers<[1], [0], [0], [1], [0, 0, 1, 1], [], []>} : vector<16x64xbf16>, vector<64x64xbf16>, vector<16x64xf32> -> vector<16x64xf32>
    %27 = arith.truncf %22 : vector<16x64xf32> to vector<16x64xbf16>
    %28 = arith.truncf %24 : vector<16x64xf32> to vector<16x64xbf16>
    %cst_18 = arith.constant dense<0.000000e+00> : vector<16x16xf32>
    %29 = tpu.matmul %27, %28, %cst_18 {dimension_numbers = #tpu.dot_dimension_numbers<[1], [1], [0], [0], [0, 0, 1, 0], [], []>} : vector<16x64xbf16>, vector<16x64xbf16>, vector<16x16xf32> -> vector<16x16xf32>
    %cst_19 = arith.constant 1.250000e-01 : f32
    %30 = vector.broadcast %cst_19 : f32 to vector<16x16xf32>
    %31 = arith.mulf %29, %30 : vector<16x16xf32>
    %cst_20 = arith.constant dense<0xFF800000> : vector<16xf32>
    %32 = vector.multi_reduction <maximumf>, %31, %cst_20 [1] : vector<16x16xf32> to vector<16xf32>
    %33 = vector.shape_cast %32 : vector<16xf32> to vector<16x1xf32>
    %34 = vector.broadcast %33 : vector<16x1xf32> to vector<16x16xf32>
    %35 = arith.subf %31, %34 : vector<16x16xf32>
    %36 = math.exp %35 : vector<16x16xf32>
    %37 = arith.truncf %36 : vector<16x16xf32> to vector<16x16xbf16>
    %38 = arith.truncf %26 : vector<16x64xf32> to vector<16x64xbf16>
    %cst_21 = arith.constant dense<0.000000e+00> : vector<16x64xf32>
    %39 = tpu.matmul %37, %38, %cst_21 {dimension_numbers = #tpu.dot_dimension_numbers<[1], [0], [0], [1], [0, 0, 1, 1], [], []>} : vector<16x16xbf16>, vector<16x64xbf16>, vector<16x64xf32> -> vector<16x64xf32>
    %cst_22 = arith.constant dense<0.000000e+00> : vector<16xf32>
    %40 = vector.multi_reduction <add>, %36, %cst_22 [1] : vector<16x16xf32> to vector<16xf32>
    %41 = vector.shape_cast %40 : vector<16xf32> to vector<16x1xf32>
    %42 = tpu.reciprocal %41 : vector<16x1xf32> -> vector<16x1xf32>
    %43 = vector.broadcast %42 : vector<16x1xf32> to vector<16x64xf32>
    %44 = arith.mulf %39, %43 : vector<16x64xf32>
    %45 = arith.addf %19, %44 : vector<16x64xf32>
    %46 = arith.truncf %45 : vector<16x64xf32> to vector<16x64xbf16>
    %c0_23 = arith.constant 0 : index
    %c0_24 = arith.constant 0 : index
    %47 = vector.load %arg7[%c0_23, %c0_24] : memref<64x128xbf16, #tpu.memory_space<vmem>>, vector<64x128xbf16>
    %cst_25 = arith.constant dense<0.000000e+00> : vector<16x128xf32>
    %48 = tpu.matmul %46, %47, %cst_25 {dimension_numbers = #tpu.dot_dimension_numbers<[1], [0], [0], [1], [0, 0, 1, 1], [], []>} : vector<16x64xbf16>, vector<64x128xbf16>, vector<16x128xf32> -> vector<16x128xf32>
    %c0_26 = arith.constant 0 : index
    %c0_27 = arith.constant 0 : index
    %49 = vector.load %arg8[%c0_26, %c0_27] : memref<1x128xf32, #tpu.memory_space<vmem>>, vector<1x128xf32>
    %50 = vector.broadcast %49 : vector<1x128xf32> to vector<16x128xf32>
    %51 = arith.addf %48, %50 : vector<16x128xf32>
    %52 = arith.mulf %51, %51 : vector<16x128xf32>
    %53 = arith.mulf %51, %52 : vector<16x128xf32>
    %cst_28 = arith.constant 4.471500e-02 : f32
    %54 = vector.broadcast %cst_28 : f32 to vector<16x128xf32>
    %55 = arith.mulf %54, %53 : vector<16x128xf32>
    %56 = arith.addf %51, %55 : vector<16x128xf32>
    %cst_29 = arith.constant 0.797884583 : f32
    %57 = vector.broadcast %cst_29 : f32 to vector<16x128xf32>
    %58 = arith.mulf %57, %56 : vector<16x128xf32>
    %59 = math.tanh %58 : vector<16x128xf32>
    %cst_30 = arith.constant 1.000000e+00 : f32
    %60 = vector.broadcast %cst_30 : f32 to vector<16x128xf32>
    %61 = arith.addf %60, %59 : vector<16x128xf32>
    %cst_31 = arith.constant 5.000000e-01 : f32
    %62 = vector.broadcast %cst_31 : f32 to vector<16x128xf32>
    %63 = arith.mulf %62, %61 : vector<16x128xf32>
    %64 = arith.mulf %51, %63 : vector<16x128xf32>
    %65 = arith.truncf %64 : vector<16x128xf32> to vector<16x128xbf16>
    %c0_32 = arith.constant 0 : index
    %c0_33 = arith.constant 0 : index
    %66 = vector.load %arg9[%c0_32, %c0_33] : memref<128x64xbf16, #tpu.memory_space<vmem>>, vector<128x64xbf16>
    %cst_34 = arith.constant dense<0.000000e+00> : vector<16x64xf32>
    %67 = tpu.matmul %65, %66, %cst_34 {dimension_numbers = #tpu.dot_dimension_numbers<[1], [0], [0], [1], [0, 0, 1, 1], [], []>} : vector<16x128xbf16>, vector<128x64xbf16>, vector<16x64xf32> -> vector<16x64xf32>
    %68 = arith.addf %45, %67 : vector<16x64xf32>
    %c0_35 = arith.constant 0 : index
    %c0_36 = arith.constant 0 : index
    %69 = vector.load %arg10[%c0_35, %c0_36] : memref<1x64xf32, #tpu.memory_space<vmem>>, vector<1x64xf32>
    %70 = vector.broadcast %69 : vector<1x64xf32> to vector<16x64xf32>
    %71 = arith.addf %68, %70 : vector<16x64xf32>
    %c0_37 = arith.constant 0 : index
    %c0_38 = arith.constant 0 : index
    %72 = vector.load %arg11[%c0_37, %c0_38] : memref<16x64xf32, #tpu.memory_space<vmem>>, vector<16x64xf32>
    tpu.vector_store %arg11[%c0_37, %c0_38], %71 {strides = array<i32>} : memref<16x64xf32, #tpu.memory_space<vmem>>, vector<16x64xf32>,
    return
  }
  func.func @transform_0(%arg0: i32) -> (i32, i32) {
    %c0_i32 = arith.constant 0 : i32
    %c0_i32_0 = arith.constant 0 : i32
    %c0_i32_1 = arith.constant 0 : i32
    return %c0_i32, %c0_i32_0 : i32, i32
  }
  func.func @transform_1(%arg0: i32) -> (i32, i32) {
    %c0_i32 = arith.constant 0 : i32
    %c0_i32_0 = arith.constant 0 : i32
    %c0_i32_1 = arith.constant 0 : i32
    return %c0_i32, %c0_i32_0 : i32, i32
  }
  func.func @transform_2(%arg0: i32) -> (i32, i32) {
    %c0_i32 = arith.constant 0 : i32
    %c0_i32_0 = arith.constant 0 : i32
    %c0_i32_1 = arith.constant 0 : i32
    return %c0_i32, %c0_i32_0 : i32, i32
  }
  func.func @transform_3(%arg0: i32) -> (i32, i32) {
    %c0_i32 = arith.constant 0 : i32
    %c0_i32_0 = arith.constant 0 : i32
    %c0_i32_1 = arith.constant 0 : i32
    return %c0_i32, %c0_i32_0 : i32, i32
  }
  func.func @transform_4(%arg0: i32) -> (i32, i32) {
    %c0_i32 = arith.constant 0 : i32
    %c0_i32_0 = arith.constant 0 : i32
    %c0_i32_1 = arith.constant 0 : i32
    return %c0_i32, %c0_i32_0 : i32, i32
  }
  func.func @transform_5(%arg0: i32) -> (i32, i32) {
    %c0_i32 = arith.constant 0 : i32
    %c0_i32_0 = arith.constant 0 : i32
    %c0_i32_1 = arith.constant 0 : i32
    return %c0_i32, %c0_i32_0 : i32, i32
  }
  func.func @transform_6(%arg0: i32) -> (i32, i32) {
    %c0_i32 = arith.constant 0 : i32
    %c0_i32_0 = arith.constant 0 : i32
    %c0_i32_1 = arith.constant 0 : i32
    return %c0_i32, %c0_i32_0 : i32, i32
  }
  func.func @transform_7(%arg0: i32) -> (i32, i32) {
    %c0_i32 = arith.constant 0 : i32
    %c0_i32_0 = arith.constant 0 : i32
    %c0_i32_1 = arith.constant 0 : i32
    return %c0_i32, %c0_i32_0 : i32, i32
  }
  func.func @transform_8(%arg0: i32) -> (i32, i32) {
    %c0_i32 = arith.constant 0 : i32
    %c0_i32_0 = arith.constant 0 : i32
    %c0_i32_1 = arith.constant 0 : i32
    return %c0_i32, %c0_i32_0 : i32, i32
  }
  func.func @transform_9(%arg0: i32) -> (i32, i32) {
    %c0_i32 = arith.constant 0 : i32
    %c0_i32_0 = arith.constant 0 : i32
    %c0_i32_1 = arith.constant 0 : i32
    return %c0_i32, %c0_i32_0 : i32, i32
  }
  func.func @transform_10(%arg0: i32) -> (i32, i32) {
    %c0_i32 = arith.constant 0 : i32
    %c0_i32_0 = arith.constant 0 : i32
    %c0_i32_1 = arith.constant 0 : i32
    return %c0_i32, %c0_i32_0 : i32, i32
  }
}

</mosaic_0001>

<llo_original>
// kernel: tpu_custom_call.1
$region0: #{tpu_custom_call.1}
  #allocation0 [shape = 'u32[]', space=smem, size = 0x4, offset = 0x4, fixed_abs, tag = 'smem constant byte address 0x4 - core index']
  #allocation1 [shape = 'u32[144,128]{1,0:T(1,128)}', space=vmem, size = 0x12000, scoped, tag = 'internal scratch']
  %s0 = inlined_call_operand.hbm [shape: f32[16,32], index: 0, kind: input, shape index: {}]
  %s1 = inlined_call_operand.hbm [shape: bf16[32,64], index: 1, kind: input, shape index: {}]
  %s2 = inlined_call_operand.vmem [shape: f32[1,64], index: 2, kind: input, shape index: {}]
  %s3 = inlined_call_operand.vmem [shape: bf16[64,64], index: 3, kind: input, shape index: {}]
  %s4 = inlined_call_operand.vmem [shape: bf16[64,64], index: 4, kind: input, shape index: {}]
  %s5 = inlined_call_operand.vmem [shape: bf16[64,64], index: 5, kind: input, shape index: {}]
  %s6 = inlined_call_operand.hbm [shape: bf16[64,128], index: 6, kind: input, shape index: {}]
  %s7 = inlined_call_operand.vmem [shape: f32[1,128], index: 7, kind: input, shape index: {}]
  %s8 = inlined_call_operand.vmem [shape: bf16[128,64], index: 8, kind: input, shape index: {}]
  %s9 = inlined_call_operand.vmem [shape: f32[1,64], index: 9, kind: input, shape index: {}]
  %s10 = inlined_call_operand.hbm [shape: f32[16,64], index: 10, kind: output, shape index: {}]
  %s11 = sld [smem:[#allocation0]]
  $region62: #{tpu_custom_call.1} parent=0
    _
  %s13 = ssub.s32 1, %s11
  %s14 = scalar_select 0, %s13, %s11
  $region1: #{tpu_custom_call.1} parent=0
    #allocation2 [shape = 'u8[8192]{0}', space=vmem, size = 0x2000, scoped, tag = 'input window, operand 0, single buffered']
    #allocation3 [shape = 's32[1]{0}', space=sflag, size = 0x4, scoped, tag = 'scoped memory for tpu_custom_call.1']
    #allocation4 [shape = 's32[1]{0}', space=sflag, size = 0x4, scoped, tag = 'scoped memory for tpu_custom_call.1']
    #allocation5 [shape = 'u8[8192]{0}', space=vmem, size = 0x2000, scoped, tag = 'input window, operand 1, single buffered']
    #allocation6 [shape = 's32[1]{0}', space=sflag, size = 0x4, scoped, tag = 'scoped memory for tpu_custom_call.1']
    #allocation7 [shape = 'u8[16384]{0}', space=vmem, size = 0x4000, scoped, tag = 'input window, operand 6, single buffered']
    #allocation8 [shape = 'u8[8192]{0}', space=vmem, size = 0x2000, scoped, tag = 'output window, operand 0, single buffered']
    %15 = vsyncpa [#allocation3], 0
    %16 = vsyncpa [#allocation6], 0
    %17 = vsyncpa [#allocation4], 0
    // Predicated region
    $region2: #{tpu_custom_call.1} parent=1 // pred_check
      _
    $region3: #{tpu_custom_call.1} parent=1 // pred_check_branch
      %19 = sbr.rel (0) target = $region5
    $region4: #{tpu_custom_call.1} parent=1 // pred_region
      %s21 = ssub.s32 256, 256
      %22 = vsyncadd [#allocation3], %s21
      %s23 = sshll.u32 [#allocation2], 4
      %s24 = int_to_ptr.vmem [resolvable:$true] %s23
      %29 = dma.hbm_to_vmem [thread:$0]  %s0, 256, %s24, [#allocation3], 128, 128, 8
    $region5: #{tpu_custom_call.1} parent=1 // pred_fallthru
      _
    // Predicated region
    $region6: #{tpu_custom_call.1} parent=1 // pred_check
      _
    $region7: #{tpu_custom_call.1} parent=1 // pred_check_branch
      %31 = sbr.rel (0) target = $region9
    $region8: #{tpu_custom_call.1} parent=1 // pred_region
      %s33 = ssub.s32 256, 256
      %34 = vsyncadd [#allocation6], %s33
      %s35 = sshll.u32 [#allocation5], 4
      %s36 = int_to_ptr.vmem [resolvable:$true] %s35
      %41 = dma.hbm_to_vmem [thread:$0]  %s1, 256, %s36, [#allocation6], 64, 64, 4
    $region9: #{tpu_custom_call.1} parent=1 // pred_fallthru
      _
    // Predicated region
    $region10: #{tpu_custom_call.1} parent=1 // pred_check
      _
    $region11: #{tpu_custom_call.1} parent=1 // pred_check_branch
      %43 = sbr.rel (0) target = $region13
    $region12: #{tpu_custom_call.1} parent=1 // pred_region
      _
    $region13: #{tpu_custom_call.1} parent=1 // pred_fallthru
      _
    // Predicated region
    $region14: #{tpu_custom_call.1} parent=1 // pred_check
      _
    $region15: #{tpu_custom_call.1} parent=1 // pred_check_branch
      %45 = sbr.rel (0) target = $region17
    $region16: #{tpu_custom_call.1} parent=1 // pred_region
      _
    $region17: #{tpu_custom_call.1} parent=1 // pred_fallthru
      _
    // Predicated region
    $region18: #{tpu_custom_call.1} parent=1 // pred_check
      _
    $region19: #{tpu_custom_call.1} parent=1 // pred_check_branch
      %47 = sbr.rel (0) target = $region21
    $region20: #{tpu_custom_call.1} parent=1 // pred_region
      _
    $region21: #{tpu_custom_call.1} parent=1 // pred_fallthru
      _
    // Predicated region
    $region22: #{tpu_custom_call.1} parent=1 // pred_check
      _
    $region23: #{tpu_custom_call.1} parent=1 // pred_check_branch
      %49 = sbr.rel (0) target = $region25
    $region24: #{tpu_custom_call.1} parent=1 // pred_region
      _
    $region25: #{tpu_custom_call.1} parent=1 // pred_fallthru
      _
    // Predicated region
    $region26: #{tpu_custom_call.1} parent=1 // pred_check
      _
    $region27: #{tpu_custom_call.1} parent=1 // pred_check_branch
      %51 = sbr.rel (0) target = $region29
    $region28: #{tpu_custom_call.1} parent=1 // pred_region
      %s53 = ssub.s32 512, 512
      %54 = vsyncadd [#allocation6], %s53
      %s55 = sshll.u32 [#allocation7], 4
      %s56 = int_to_ptr.vmem [resolvable:$true] %s55
      %61 = dma.hbm_to_vmem [thread:$0]  %s6, 512, %s56, [#allocation6], 64, 64, 4
    $region29: #{tpu_custom_call.1} parent=1 // pred_fallthru
      _
    // Predicated region
    $region30: #{tpu_custom_call.1} parent=1 // pred_check
      _
    $region31: #{tpu_custom_call.1} parent=1 // pred_check_branch
      %63 = sbr.rel (0) target = $region33
    $region32: #{tpu_custom_call.1} parent=1 // pred_region
      _
    $region33: #{tpu_custom_call.1} parent=1 // pred_fallthru
      _
    // Predicated region
    $region34: #{tpu_custom_call.1} parent=1 // pred_check
      _
    $region35: #{tpu_custom_call.1} parent=1 // pred_check_branch
      %65 = sbr.rel (0) target = $region37
    $region36: #{tpu_custom_call.1} parent=1 // pred_region
      _
    $region37: #{tpu_custom_call.1} parent=1 // pred_fallthru
      _
    // Predicated region
    $region38: #{tpu_custom_call.1} parent=1 // pred_check
      _
    $region39: #{tpu_custom_call.1} parent=1 // pred_check_branch
      %67 = sbr.rel (0) target = $region41
    $region40: #{tpu_custom_call.1} parent=1 // pred_region
      _
    $region41: #{tpu_custom_call.1} parent=1 // pred_fallthru
      _
    // Predicated region
    $region42: #{tpu_custom_call.1} parent=1 // pred_check
      _
    $region43: #{tpu_custom_call.1} parent=1 // pred_check_branch
      %69 = sbr.rel (0) target = $region45
    $region44: #{tpu_custom_call.1} parent=1 // pred_region
      %70 = dma.done [#allocation3], 256
    $region45: #{tpu_custom_call.1} parent=1 // pred_fallthru
      _
    // Predicated region
    $region46: #{tpu_custom_call.1} parent=1 // pred_check
      _
    $region47: #{tpu_custom_call.1} parent=1 // pred_check_branch
      %72 = sbr.rel (0) target = $region49
    $region48: #{tpu_custom_call.1} parent=1 // pred_region
      %73 = dma.done [#allocation6], 256
    $region49: #{tpu_custom_call.1} parent=1 // pred_fallthru
      _
    // Predicated region
    $region50: #{tpu_custom_call.1} parent=1 // pred_check
      _
    $region51: #{tpu_custom_call.1} parent=1 // pred_check_branch
      %75 = sbr.rel (0) target = $region53
    $region52: #{tpu_custom_call.1} parent=1 // pred_region
      %76 = dma.done [#allocation6], 512
    $region53: #{tpu_custom_call.1} parent=1 // pred_fallthru
      _
    %v78 = vld [vmem:[#allocation2] sm:$0xff]
    %v79 = vld [vmem:[#allocation2 + $0x8] sm:$0xff]
    %v80 = vpack.c.bf16 %v79, %v78
    %v81 = vld [vmem:[#allocation5] sm:$0xf]
    %v82 = vld [vmem:[#allocation5 + $0x4] sm:$0xf]
    %v83 = vld [vmem:[#allocation5 + $0x8] sm:$0xf]
    %v84 = vld [vmem:[#allocation5 + $0xc] sm:$0xf]
    %v85 = vld [vmem:[%s2] sm:$0x1]
    %v87 = vlaneseq
    %v88 = vshrl.u32 %v87, 7
    %v89 = vsub.s32 0, %v88
    %v90 = vrot.slane %v85, %v89
    %v96 = vunpack.c.l.b16 %v81
    %v97 = vunpack.c.l.b16 %v82
    %v98 = vunpack.c.l.b16 %v83
    %v99 = vunpack.c.l.b16 %v84
    %v100 = vpack.c.b16 %v97, %v96
    %v101 = vpack.c.b16 %v99, %v98
    %vm104 = vcmask 261120
    %v106 = vsel %vm104, %v80, 0
    %108 = vmatprep.subr.bf16.mxu0 0
    %109 = vmatpush1.bf16.msra.mxu0 0
    %110 = vmatprep.subr.bf16.mxu0 0
    %111 = vmatpush1.bf16.msra.mxu0 0
    %112 = vmatprep.subr.bf16.mxu0 0
    %113 = vmatpush1.bf16.msra.mxu0 0
    %114 = vmatprep.subr.bf16.mxu0 0
    %115 = vmatpush1.bf16.msra.mxu0 0
    %116 = vmatprep.subr.bf16.mxu0 0
    %117 = vmatpush1.bf16.msra.mxu0 0
    %118 = vmatprep.subr.bf16.mxu0 0
    %119 = vmatpush1.bf16.msra.mxu0 0
    %120 = vmatprep.subr.bf16.mxu0 0
    %121 = vmatpush1.bf16.msra.mxu0 %v101
    %122 = vmatprep.subr.bf16.mxu0 0
    %123 = vmatpush1.bf16.msra.mxu0 %v100
    %124 = vmatprep.subr.bf16.mxu0 0
    %125 = vmatpush2.bf16.msra.mxu0 0
    %126 = vmatprep.subr.bf16.mxu0 0
    %127 = vmatpush2.bf16.msra.mxu0 0
    %128 = vmatprep.subr.bf16.mxu0 0
    %129 = vmatpush2.bf16.msra.mxu0 0
    %130 = vmatprep.subr.bf16.mxu0 0
    %131 = vmatpush2.bf16.msra.mxu0 0
    %132 = vmatprep.subr.bf16.mxu0 0
    %133 = vmatpush2.bf16.msra.mxu0 0
    %134 = vmatprep.subr.bf16.mxu0 0
    %135 = vmatpush2.bf16.msra.mxu0 0
    %136 = vmatprep.subr.bf16.mxu0 0
    %137 = vmatpush2.bf16.msra.mxu0 0
    %138 = vmatprep.subr.bf16.mxu0 0
    %139 = vmatpush2.bf16.msra.mxu0 0
    %140 = vmatprep.mubr.bf16.mxu0 0
    %141 = vmatmul.mubr.bf16.gmra.mxu0 %v106
    %v142 = vpop.f32.mrf.mxu0
    %v143 = vadd.f32 %v90, %v142
    %v144 = vpop.f32.mrf.mxu0
    %v145 = vpop.f32.mrf.mxu0
    %v146 = vadd.f32 %v90, %v145
    %v147 = vpop.f32.mrf.mxu0
    %148 = vdwg.mxu0
    %v149 = vmul.f32 %v143, %v143
    %v150 = vmul.f32 %v146, %v146
    %v151 = vmul.f32 %v143, %v149
    %v152 = vmul.f32 %v146, %v150
    %v153 = vmul.f32 %v151, 0.044715
    %v154 = vmul.f32 %v152, 0.044715
    %v155 = vadd.f32 %v143, %v153
    %v156 = vadd.f32 %v146, %v154
    %v157 = vmul.f32 %v155, 0.7978846
    %v158 = vmul.f32 %v156, 0.7978846
    %v159 = vtanh.pop %v157
    %v160 = vtanh.pop %v158
    %v161 = vadd.f32 %v159, 1.0
    %v162 = vadd.f32 %v160, 1.0
    %v163 = vmul.f32 %v161, 0.5
    %v164 = vmul.f32 %v162, 0.5
    %v165 = vmul.f32 %v143, %v163
    %v166 = vmul.f32 %v146, %v164
    %v167 = vpack.c.bf16 %v166, %v165
    %v168 = vld [vmem:[%s3] sm:$0xf]
    %v169 = vld [vmem:[%s3 + $0x4] sm:$0xf]
    %v170 = vld [vmem:[%s3 + $0x8] sm:$0xf]
    %v171 = vld [vmem:[%s3 + $0xc] sm:$0xf]
    %v172 = vld [vmem:[%s3 + $0x10] sm:$0xf]
    %v173 = vld [vmem:[%s3 + $0x14] sm:$0xf]
    %v174 = vld [vmem:[%s3 + $0x18] sm:$0xf]
    %v175 = vld [vmem:[%s3 + $0x1c] sm:$0xf]
    %v184 = vunpack.c.l.b16 %v168
    %v185 = vunpack.c.l.b16 %v169
    %v186 = vunpack.c.l.b16 %v170
    %v187 = vunpack.c.l.b16 %v171
    %v188 = vunpack.c.l.b16 %v172
    %v189 = vunpack.c.l.b16 %v173
    %v190 = vunpack.c.l.b16 %v174
    %v191 = vunpack.c.l.b16 %v175
    %v192 = vpack.c.b16 %v185, %v184
    %v193 = vpack.c.b16 %v187, %v186
    %v194 = vpack.c.b16 %v189, %v188
    %v195 = vpack.c.b16 %v191, %v190
    %vm200 = vcmask 523264
    %v202 = vsel %vm200, %v167, 0
    %204 = vmatprep.subr.bf16.mxu0 0
    %205 = vmatpush1.bf16.msra.mxu0 0
    %206 = vmatprep.subr.bf16.mxu0 0
    %207 = vmatpush1.bf16.msra.mxu0 0
    %208 = vmatprep.subr.bf16.mxu0 0
    %209 = vmatpush1.bf16.msra.mxu0 0
    %210 = vmatprep.subr.bf16.mxu0 0
    %211 = vmatpush1.bf16.msra.mxu0 0
    %212 = vmatprep.subr.bf16.mxu0 0
    %213 = vmatpush1.bf16.msra.mxu0 %v195
    %214 = vmatprep.subr.bf16.mxu0 0
    %215 = vmatpush1.bf16.msra.mxu0 %v194
    %216 = vmatprep.subr.bf16.mxu0 0
    %217 = vmatpush1.bf16.msra.mxu0 %v193
    %218 = vmatprep.subr.bf16.mxu0 0
    %219 = vmatpush1.bf16.msra.mxu0 %v192
    %220 = vmatprep.subr.bf16.mxu0 0
    %221 = vmatpush2.bf16.msra.mxu0 0
    %222 = vmatprep.subr.bf16.mxu0 0
    %223 = vmatpush2.bf16.msra.mxu0 0
    %224 = vmatprep.subr.bf16.mxu0 0
    %225 = vmatpush2.bf16.msra.mxu0 0
    %226 = vmatprep.subr.bf16.mxu0 0
    %227 = vmatpush2.bf16.msra.mxu0 0
    %228 = vmatprep.subr.bf16.mxu0 0
    %229 = vmatpush2.bf16.msra.mxu0 0
    %230 = vmatprep.subr.bf16.mxu0 0
    %231 = vmatpush2.bf16.msra.mxu0 0
    %232 = vmatprep.subr.bf16.mxu0 0
    %233 = vmatpush2.bf16.msra.mxu0 0
    %234 = vmatprep.subr.bf16.mxu0 0
    %235 = vmatpush2.bf16.msra.mxu0 0
    %236 = vmatprep.mubr.bf16.mxu0 0
    %237 = vmatmul.mubr.bf16.gmra.mxu0 %v202
    %v238 = vpop.f32.mrf.mxu0
    %v239 = vadd.f32 0.0, %v238
    %v240 = vpop.f32.mrf.mxu0
    %v241 = vpop.f32.mrf.mxu0
    %v242 = vadd.f32 0.0, %v241
    %v243 = vpop.f32.mrf.mxu0
    %244 = vdwg.mxu0
    %v245 = vld [vmem:[%s4] sm:$0xf]
    %v246 = vld [vmem:[%s4 + $0x4] sm:$0xf]
    %v247 = vld [vmem:[%s4 + $0x8] sm:$0xf]
    %v248 = vld [vmem:[%s4 + $0xc] sm:$0xf]
    %v249 = vld [vmem:[%s4 + $0x10] sm:$0xf]
    %v250 = vld [vmem:[%s4 + $0x14] sm:$0xf]
    %v251 = vld [vmem:[%s4 + $0x18] sm:$0xf]
    %v252 = vld [vmem:[%s4 + $0x1c] sm:$0xf]
    %v261 = vunpack.c.l.b16 %v245
    %v262 = vunpack.c.l.b16 %v246
    %v263 = vunpack.c.l.b16 %v247
    %v264 = vunpack.c.l.b16 %v248
    %v265 = vunpack.c.l.b16 %v249
    %v266 = vunpack.c.l.b16 %v250
    %v267 = vunpack.c.l.b16 %v251
    %v268 = vunpack.c.l.b16 %v252
    %v269 = vpack.c.b16 %v262, %v261
    %v270 = vpack.c.b16 %v264, %v263
    %v271 = vpack.c.b16 %v266, %v265
    %v272 = vpack.c.b16 %v268, %v267
    %277 = vmatprep.subr.bf16.mxu0 0
    %278 = vmatpush1.bf16.msra.mxu0 0
    %279 = vmatprep.subr.bf16.mxu0 0
    %280 = vmatpush1.bf16.msra.mxu0 0
    %281 = vmatprep.subr.bf16.mxu0 0
    %282 = vmatpush1.bf16.msra.mxu0 0
    %283 = vmatprep.subr.bf16.mxu0 0
    %284 = vmatpush1.bf16.msra.mxu0 0
    %285 = vmatprep.subr.bf16.mxu0 0
    %286 = vmatpush1.bf16.msra.mxu0 %v272
    %287 = vmatprep.subr.bf16.mxu0 0
    %288 = vmatpush1.bf16.msra.mxu0 %v271
    %289 = vmatprep.subr.bf16.mxu0 0
    %290 = vmatpush1.bf16.msra.mxu0 %v270
    %291 = vmatprep.subr.bf16.mxu0 0
    %292 = vmatpush1.bf16.msra.mxu0 %v269
    %293 = vmatprep.subr.bf16.mxu0 0
    %294 = vmatpush2.bf16.msra.mxu0 0
    %295 = vmatprep.subr.bf16.mxu0 0
    %296 = vmatpush2.bf16.msra.mxu0 0
    %297 = vmatprep.subr.bf16.mxu0 0
    %298 = vmatpush2.bf16.msra.mxu0 0
    %299 = vmatprep.subr.bf16.mxu0 0
    %300 = vmatpush2.bf16.msra.mxu0 0
    %301 = vmatprep.subr.bf16.mxu0 0
    %302 = vmatpush2.bf16.msra.mxu0 0
    %303 = vmatprep.subr.bf16.mxu0 0
    %304 = vmatpush2.bf16.msra.mxu0 0
    %305 = vmatprep.subr.bf16.mxu0 0
    %306 = vmatpush2.bf16.msra.mxu0 0
    %307 = vmatprep.subr.bf16.mxu0 0
    %308 = vmatpush2.bf16.msra.mxu0 0
    %309 = vmatprep.mubr.bf16.mxu0 0
    %310 = vmatmul.mubr.bf16.gmra.mxu0 %v202
    %v311 = vpop.f32.mrf.mxu0
    %v312 = vadd.f32 0.0, %v311
    %v313 = vpop.f32.mrf.mxu0
    %v314 = vpop.f32.mrf.mxu0
    %v315 = vadd.f32 0.0, %v314
    %v316 = vpop.f32.mrf.mxu0
    %317 = vdwg.mxu0
    %v318 = vld [vmem:[%s5] sm:$0xf]
    %v319 = vld [vmem:[%s5 + $0x4] sm:$0xf]
    %v320 = vld [vmem:[%s5 + $0x8] sm:$0xf]
    %v321 = vld [vmem:[%s5 + $0xc] sm:$0xf]
    %v322 = vld [vmem:[%s5 + $0x10] sm:$0xf]
    %v323 = vld [vmem:[%s5 + $0x14] sm:$0xf]
    %v324 = vld [vmem:[%s5 + $0x18] sm:$0xf]
    %v325 = vld [vmem:[%s5 + $0x1c] sm:$0xf]
    %v334 = vunpack.c.l.b16 %v318
    %v335 = vunpack.c.l.b16 %v319
    %v336 = vunpack.c.l.b16 %v320
    %v337 = vunpack.c.l.b16 %v321
    %v338 = vunpack.c.l.b16 %v322
    %v339 = vunpack.c.l.b16 %v323
    %v340 = vunpack.c.l.b16 %v324
    %v341 = vunpack.c.l.b16 %v325
    %v342 = vpack.c.b16 %v335, %v334
    %v343 = vpack.c.b16 %v337, %v336
    %v344 = vpack.c.b16 %v339, %v338
    %v345 = vpack.c.b16 %v341, %v340
    %350 = vmatprep.subr.bf16.mxu0 0
    %351 = vmatpush1.bf16.msra.mxu0 0
    %352 = vmatprep.subr.bf16.mxu0 0
    %353 = vmatpush1.bf16.msra.mxu0 0
    %354 = vmatprep.subr.bf16.mxu0 0
    %355 = vmatpush1.bf16.msra.mxu0 0
    %356 = vmatprep.subr.bf16.mxu0 0
    %357 = vmatpush1.bf16.msra.mxu0 0
    %358 = vmatprep.subr.bf16.mxu0 0
    %359 = vmatpush1.bf16.msra.mxu0 %v345
    %360 = vmatprep.subr.bf16.mxu0 0
    %361 = vmatpush1.bf16.msra.mxu0 %v344
    %362 = vmatprep.subr.bf16.mxu0 0
    %363 = vmatpush1.bf16.msra.mxu0 %v343
    %364 = vmatprep.subr.bf16.mxu0 0
    %365 = vmatpush1.bf16.msra.mxu0 %v342
    %366 = vmatprep.subr.bf16.mxu0 0
    %367 = vmatpush2.bf16.msra.mxu0 0
    %368 = vmatprep.subr.bf16.mxu0 0
    %369 = vmatpush2.bf16.msra.mxu0 0
    %370 = vmatprep.subr.bf16.mxu0 0
    %371 = vmatpush2.bf16.msra.mxu0 0
    %372 = vmatprep.subr.bf16.mxu0 0
    %373 = vmatpush2.bf16.msra.mxu0 0
    %374 = vmatprep.subr.bf16.mxu0 0
    %375 = vmatpush2.bf16.msra.mxu0 0
    %376 = vmatprep.subr.bf16.mxu0 0
    %377 = vmatpush2.bf16.msra.mxu0 0
    %378 = vmatprep.subr.bf16.mxu0 0
    %379 = vmatpush2.bf16.msra.mxu0 0
    %380 = vmatprep.subr.bf16.mxu0 0
    %381 = vmatpush2.bf16.msra.mxu0 0
    %382 = vmatprep.mubr.bf16.mxu0 0
    %383 = vmatmul.mubr.bf16.gmra.mxu0 %v202
    %v384 = vpop.f32.mrf.mxu0
    %v385 = vadd.f32 0.0, %v384
    %v386 = vpop.f32.mrf.mxu0
    %v387 = vpop.f32.mrf.mxu0
    %v388 = vadd.f32 0.0, %v387
    %v389 = vpop.f32.mrf.mxu0
    %390 = vdwg.mxu0
    %v391 = vpack.c.bf16 %v242, %v239
    %v392 = vpack.c.bf16 %v315, %v312
    %v394 = vsel %vm200, %v391, 0
    %v397 = vsel %vm200, %v392, 0
    %399 = vmatprep.subr.bf16.mxu0 0
    %400 = vmatpush1.bf16.xpose.msra.mxu0 0
    %401 = vmatprep.subr.bf16.mxu0 0
    %402 = vmatpush1.bf16.xpose.msra.mxu0 0
    %403 = vmatprep.subr.bf16.mxu0 0
    %404 = vmatpush1.bf16.xpose.msra.mxu0 0
    %405 = vmatprep.subr.bf16.mxu0 0
    %406 = vmatpush1.bf16.xpose.msra.mxu0 0
    %407 = vmatprep.subr.bf16.mxu0 0
    %408 = vmatpush1.bf16.xpose.msra.mxu0 0
    %409 = vmatprep.subr.bf16.mxu0 0
    %410 = vmatpush1.bf16.xpose.msra.mxu0 0
    %411 = vmatprep.subr.bf16.mxu0 0
    %412 = vmatpush1.bf16.xpose.msra.mxu0 0
    %413 = vmatprep.subr.bf16.mxu0 0
    %414 = vmatpush1.bf16.xpose.msra.mxu0 %v397
    %415 = vmatprep.subr.bf16.mxu0 0
    %416 = vmatpush2.bf16.xpose.msra.mxu0 0
    %417 = vmatprep.subr.bf16.mxu0 0
    %418 = vmatpush2.bf16.xpose.msra.mxu0 0
    %419 = vmatprep.subr.bf16.mxu0 0
    %420 = vmatpush2.bf16.xpose.msra.mxu0 0
    %421 = vmatprep.subr.bf16.mxu0 0
    %422 = vmatpush2.bf16.xpose.msra.mxu0 0
    %423 = vmatprep.subr.bf16.mxu0 0
    %424 = vmatpush2.bf16.xpose.msra.mxu0 0
    %425 = vmatprep.subr.bf16.mxu0 0
    %426 = vmatpush2.bf16.xpose.msra.mxu0 0
    %427 = vmatprep.subr.bf16.mxu0 0
    %428 = vmatpush2.bf16.xpose.msra.mxu0 0
    %429 = vmatprep.subr.bf16.mxu0 0
    %430 = vmatpush2.bf16.xpose.msra.mxu0 0
    %431 = vmatprep.mubr.bf16.mxu0 0
    %432 = vmatmul.mubr.bf16.gmra.mxu0 %v394
    %v433 = vpop.f32.mrf.mxu0
    %v434 = vadd.f32 0.0, %v433
    %v435 = vpop.f32.mrf.mxu0
    %v436 = vpop.f32.mrf.mxu0
    %v437 = vadd.f32 0.0, %v436
    %v438 = vpop.f32.mrf.mxu0
    %439 = vdwg.mxu0
    %v440 = vmul.f32 %v434, 0.125
    %v441 = vmul.f32 %v437, 0.125
    %vm442 = vcmask 130048
    %v443 = vsel %vm442, %v440, -inf
    %444 = vmax.xlane.f32.xlu0 %v443
    %v445 = vpop.xlane.xlu0 %444
    %v446 = vsel %vm442, %v441, -inf
    %447 = vmax.xlane.f32.xlu0 %v446
    %v448 = vpop.xlane.xlu0 %447
    %v449 = vsub.f32 %v440, %v445
    %v450 = vsub.f32 %v441, %v448
    %v451 = vmul.f32 %v449, 1.442695
    %v452 = vpow.pop %v451
    %v453 = vmul.f32 %v450, 1.442695
    %v454 = vpow.pop %v453
    %v455 = vpack.c.bf16 %v454, %v452
    %v456 = vpack.c.bf16 %v388, %v385
    %v458 = vsel %vm442, %v455, 0
    %460 = vmatprep.subr.bf16.mxu0 0
    %461 = vmatpush1.bf16.msra.mxu0 0
    %462 = vmatprep.subr.bf16.mxu0 0
    %463 = vmatpush1.bf16.msra.mxu0 0
    %464 = vmatprep.subr.bf16.mxu0 0
    %465 = vmatpush1.bf16.msra.mxu0 0
    %466 = vmatprep.subr.bf16.mxu0 0
    %467 = vmatpush1.bf16.msra.mxu0 0
    %468 = vmatprep.subr.bf16.mxu0 0
    %469 = vmatpush1.bf16.msra.mxu0 0
    %470 = vmatprep.subr.bf16.mxu0 0
    %471 = vmatpush1.bf16.msra.mxu0 0
    %472 = vmatprep.subr.bf16.mxu0 0
    %473 = vmatpush1.bf16.msra.mxu0 0
    %474 = vmatprep.subr.bf16.mxu0 0
    %475 = vmatpush1.bf16.msra.mxu0 %v456
    %476 = vmatprep.subr.bf16.mxu0 0
    %477 = vmatpush2.bf16.msra.mxu0 0
    %478 = vmatprep.subr.bf16.mxu0 0
    %479 = vmatpush2.bf16.msra.mxu0 0
    %480 = vmatprep.subr.bf16.mxu0 0
    %481 = vmatpush2.bf16.msra.mxu0 0
    %482 = vmatprep.subr.bf16.mxu0 0
    %483 = vmatpush2.bf16.msra.mxu0 0
    %484 = vmatprep.subr.bf16.mxu0 0
    %485 = vmatpush2.bf16.msra.mxu0 0
    %486 = vmatprep.subr.bf16.mxu0 0
    %487 = vmatpush2.bf16.msra.mxu0 0
    %488 = vmatprep.subr.bf16.mxu0 0
    %489 = vmatpush2.bf16.msra.mxu0 0
    %490 = vmatprep.subr.bf16.mxu0 0
    %491 = vmatpush2.bf16.msra.mxu0 0
    %492 = vmatprep.mubr.bf16.mxu0 0
    %493 = vmatmul.mubr.bf16.gmra.mxu0 %v458
    %v494 = vpop.f32.mrf.mxu0
    %v495 = vadd.f32 0.0, %v494
    %v496 = vpop.f32.mrf.mxu0
    %v497 = vpop.f32.mrf.mxu0
    %v498 = vadd.f32 0.0, %v497
    %v499 = vpop.f32.mrf.mxu0
    %500 = vdwg.mxu0
    %v501 = vsel %vm442, %v452, 0.0
    %502 = vadd.xlane.f32.xlu0 %v501
    %v503 = vpop.xlane.xlu0 %502
    %v504 = vsel %vm442, %v454, 0.0
    %505 = vadd.xlane.f32.xlu0 %v504
    %v506 = vpop.xlane.xlu0 %505
    %v507 = vrcp.pop %v503
    %v508 = vrcp.pop %v506
    %v509 = vmul.f32 %v495, %v507
    %v510 = vmul.f32 %v498, %v508
    %v511 = vadd.f32 %v165, %v509
    %v512 = vadd.f32 %v166, %v510
    %v513 = vpack.c.bf16 %v512, %v511
    %v514 = vld [vmem:[#allocation7] sm:$0xf]
    %v515 = vld [vmem:[#allocation7 + $0x4] sm:$0xf]
    %v516 = vld [vmem:[#allocation7 + $0x8] sm:$0xf]
    %v517 = vld [vmem:[#allocation7 + $0xc] sm:$0xf]
    %v518 = vld [vmem:[#allocation7 + $0x10] sm:$0xf]
    %v519 = vld [vmem:[#allocation7 + $0x14] sm:$0xf]
    %v520 = vld [vmem:[#allocation7 + $0x18] sm:$0xf]
    %v521 = vld [vmem:[#allocation7 + $0x1c] sm:$0xf]
    %v522 = vld [vmem:[%s7] sm:$0x1]
    %v524 = vlaneseq
    %v525 = vshrl.u32 %v524, 7
    %v526 = vsub.s32 0, %v525
    %v527 = vrot.slane %v522, %v526
    %v537 = vunpack.c.l.b16 %v514
    %v538 = vunpack.c.l.b16 %v515
    %v539 = vunpack.c.l.b16 %v516
    %v540 = vunpack.c.l.b16 %v517
    %v541 = vunpack.c.l.b16 %v518
    %v542 = vunpack.c.l.b16 %v519
    %v543 = vunpack.c.l.b16 %v520
    %v544 = vunpack.c.l.b16 %v521
    %v545 = vpack.c.b16 %v538, %v537
    %v546 = vpack.c.b16 %v540, %v539
    %v547 = vpack.c.b16 %v542, %v541
    %v548 = vpack.c.b16 %v544, %v543
    %v554 = vsel %vm200, %v513, 0
    %556 = vmatprep.subr.bf16.mxu0 0
    %557 = vmatpush1.bf16.msra.mxu0 0
    %558 = vmatprep.subr.bf16.mxu0 0
    %559 = vmatpush1.bf16.msra.mxu0 0
    %560 = vmatprep.subr.bf16.mxu0 0
    %561 = vmatpush1.bf16.msra.mxu0 0
    %562 = vmatprep.subr.bf16.mxu0 0
    %563 = vmatpush1.bf16.msra.mxu0 0
    %564 = vmatprep.subr.bf16.mxu0 0
    %565 = vmatpush1.bf16.msra.mxu0 %v548
    %566 = vmatprep.subr.bf16.mxu0 0
    %567 = vmatpush1.bf16.msra.mxu0 %v547
    %568 = vmatprep.subr.bf16.mxu0 0
    %569 = vmatpush1.bf16.msra.mxu0 %v546
    %570 = vmatprep.subr.bf16.mxu0 0
    %571 = vmatpush1.bf16.msra.mxu0 %v545
    %572 = vmatprep.subr.bf16.mxu0 0
    %573 = vmatpush2.bf16.msra.mxu0 0
    %574 = vmatprep.subr.bf16.mxu0 0
    %575 = vmatpush2.bf16.msra.mxu0 0
    %576 = vmatprep.subr.bf16.mxu0 0
    %577 = vmatpush2.bf16.msra.mxu0 0
    %578 = vmatprep.subr.bf16.mxu0 0
    %579 = vmatpush2.bf16.msra.mxu0 0
    %580 = vmatprep.subr.bf16.mxu0 0
    %581 = vmatpush2.bf16.msra.mxu0 0
    %582 = vmatprep.subr.bf16.mxu0 0
    %583 = vmatpush2.bf16.msra.mxu0 0
    %584 = vmatprep.subr.bf16.mxu0 0
    %585 = vmatpush2.bf16.msra.mxu0 0
    %586 = vmatprep.subr.bf16.mxu0 0
    %587 = vmatpush2.bf16.msra.mxu0 0
    %588 = vmatprep.mubr.bf16.mxu0 0
    %589 = vmatmul.mubr.bf16.gmra.mxu0 %v554
    %v590 = vpop.f32.mrf.mxu0
    %v591 = vadd.f32 %v527, %v590
    %v592 = vpop.f32.mrf.mxu0
    %v593 = vpop.f32.mrf.mxu0
    %v594 = vadd.f32 %v527, %v593
    %v595 = vpop.f32.mrf.mxu0
    %596 = vdwg.mxu0
    %v597 = vmul.f32 %v591, %v591
    %v598 = vmul.f32 %v594, %v594
    %v599 = vmul.f32 %v591, %v597
    %v600 = vmul.f32 %v594, %v598
    %v601 = vmul.f32 %v599, 0.044715
    %v602 = vmul.f32 %v600, 0.044715
    %v603 = vadd.f32 %v591, %v601
    %v604 = vadd.f32 %v594, %v602
    %v605 = vmul.f32 %v603, 0.7978846
    %v606 = vmul.f32 %v604, 0.7978846
    %v607 = vtanh.pop %v605
    %v608 = vtanh.pop %v606
    %v609 = vadd.f32 %v607, 1.0
    %v610 = vadd.f32 %v608, 1.0
    %v611 = vmul.f32 %v609, 0.5
    %v612 = vmul.f32 %v610, 0.5
    %v613 = vmul.f32 %v591, %v611
    %v614 = vmul.f32 %v594, %v612
    %v615 = vpack.c.bf16 %v614, %v613
    %v616 = vld [vmem:[%s8] sm:$0xf]
    %v617 = vld [vmem:[%s8 + $0x4] sm:$0xf]
    %v618 = vld [vmem:[%s8 + $0x8] sm:$0xf]
    %v619 = vld [vmem:[%s8 + $0xc] sm:$0xf]
    %v620 = vld [vmem:[%s8 + $0x10] sm:$0xf]
    %v621 = vld [vmem:[%s8 + $0x14] sm:$0xf]
    %v622 = vld [vmem:[%s8 + $0x18] sm:$0xf]
    %v623 = vld [vmem:[%s8 + $0x1c] sm:$0xf]
    %v624 = vld [vmem:[%s8 + $0x20] sm:$0xf]
    %v625 = vld [vmem:[%s8 + $0x24] sm:$0xf]
    %v626 = vld [vmem:[%s8 + $0x28] sm:$0xf]
    %v627 = vld [vmem:[%s8 + $0x2c] sm:$0xf]
    %v628 = vld [vmem:[%s8 + $0x30] sm:$0xf]
    %v629 = vld [vmem:[%s8 + $0x34] sm:$0xf]
    %v630 = vld [vmem:[%s8 + $0x38] sm:$0xf]
    %v631 = vld [vmem:[%s8 + $0x3c] sm:$0xf]
    %v648 = vunpack.c.l.b16 %v616
    %v649 = vunpack.c.l.b16 %v617
    %v650 = vunpack.c.l.b16 %v618
    %v651 = vunpack.c.l.b16 %v619
    %v652 = vunpack.c.l.b16 %v620
    %v653 = vunpack.c.l.b16 %v621
    %v654 = vunpack.c.l.b16 %v622
    %v655 = vunpack.c.l.b16 %v623
    %v656 = vunpack.c.l.b16 %v624
    %v657 = vunpack.c.l.b16 %v625
    %v658 = vunpack.c.l.b16 %v626
    %v659 = vunpack.c.l.b16 %v627
    %v660 = vunpack.c.l.b16 %v628
    %v661 = vunpack.c.l.b16 %v629
    %v662 = vunpack.c.l.b16 %v630
    %v663 = vunpack.c.l.b16 %v631
    %v664 = vpack.c.b16 %v649, %v648
    %v665 = vpack.c.b16 %v651, %v650
    %v666 = vpack.c.b16 %v653, %v652
    %v667 = vpack.c.b16 %v655, %v654
    %v668 = vpack.c.b16 %v657, %v656
    %v669 = vpack.c.b16 %v659, %v658
    %v670 = vpack.c.b16 %v661, %v660
    %v671 = vpack.c.b16 %v663, %v662
    %680 = vmatprep.subr.bf16.mxu0 0
    %681 = vmatpush1.bf16.msra.mxu0 %v671
    %682 = vmatprep.subr.bf16.mxu0 0
    %683 = vmatpush1.bf16.msra.mxu0 %v670
    %684 = vmatprep.subr.bf16.mxu0 0
    %685 = vmatpush1.bf16.msra.mxu0 %v669
    %686 = vmatprep.subr.bf16.mxu0 0
    %687 = vmatpush1.bf16.msra.mxu0 %v668
    %688 = vmatprep.subr.bf16.mxu0 0
    %689 = vmatpush1.bf16.msra.mxu0 %v667
    %690 = vmatprep.subr.bf16.mxu0 0
    %691 = vmatpush1.bf16.msra.mxu0 %v666
    %692 = vmatprep.subr.bf16.mxu0 0
    %693 = vmatpush1.bf16.msra.mxu0 %v665
    %694 = vmatprep.subr.bf16.mxu0 0
    %695 = vmatpush1.bf16.msra.mxu0 %v664
    %696 = vmatprep.subr.bf16.mxu0 0
    %697 = vmatpush2.bf16.msra.mxu0 0
    %698 = vmatprep.subr.bf16.mxu0 0
    %699 = vmatpush2.bf16.msra.mxu0 0
    %700 = vmatprep.subr.bf16.mxu0 0
    %701 = vmatpush2.bf16.msra.mxu0 0
    %702 = vmatprep.subr.bf16.mxu0 0
    %703 = vmatpush2.bf16.msra.mxu0 0
    %704 = vmatprep.subr.bf16.mxu0 0
    %705 = vmatpush2.bf16.msra.mxu0 0
    %706 = vmatprep.subr.bf16.mxu0 0
    %707 = vmatpush2.bf16.msra.mxu0 0
    %708 = vmatprep.subr.bf16.mxu0 0
    %709 = vmatpush2.bf16.msra.mxu0 0
    %710 = vmatprep.subr.bf16.mxu0 0
    %711 = vmatpush2.bf16.msra.mxu0 0
    %712 = vmatprep.mubr.bf16.mxu0 0
    %713 = vmatmul.mubr.bf16.gmra.mxu0 %v615
    %v714 = vpop.f32.mrf.mxu0
    %v715 = vadd.f32 0.0, %v714
    %v716 = vpop.f32.mrf.mxu0
    %v717 = vpop.f32.mrf.mxu0
    %v718 = vadd.f32 0.0, %v717
    %v719 = vpop.f32.mrf.mxu0
    %720 = vdwg.mxu0
    %v721 = vadd.f32 %v511, %v715
    %v722 = vadd.f32 %v512, %v718
    %v723 = vld [vmem:[%s9] sm:$0x1]
    %v725 = vlaneseq
    %v726 = vshrl.u32 %v725, 7
    %v727 = vsub.s32 0, %v726
    %v728 = vrot.slane %v723, %v727
    %v730 = vadd.f32 %v721, %v728
    %v731 = vadd.f32 %v722, %v728
    %732 = vst.msk [vmem:[#allocation8] sm:$0xff] %vm200, %v730
    %733 = vst.msk [vmem:[#allocation8 + $0x8] sm:$0xff] %vm200, %v731
    // Predicated region
    $region54: #{tpu_custom_call.1} parent=1 // pred_check
      _
    $region55: #{tpu_custom_call.1} parent=1 // pred_check_branch
      %735 = sbr.rel (0) target = $region57
    $region56: #{tpu_custom_call.1} parent=1 // pred_region
      %s737 = ssub.s32 256, 256
      %738 = vsyncadd [#allocation4], %s737
      %s739 = sshll.u32 [#allocation8], 4
      %s740 = int_to_ptr.vmem [resolvable:$true] %s739
      %745 = dma.vmem_to_hbm [thread:$0]  %s740, 256, %s10, [#allocation4], 128, 128, 8
    $region57: #{tpu_custom_call.1} parent=1 // pred_fallthru
      _
    // Predicated region
    $region58: #{tpu_custom_call.1} parent=1 // pred_check
      _
    $region59: #{tpu_custom_call.1} parent=1 // pred_check_branch
      %747 = sbr.rel (0) target = $region61
    $region60: #{tpu_custom_call.1} parent=1 // pred_region
      %748 = dma.done [#allocation4], 256
    $region61: #{tpu_custom_call.1} parent=1 // pred_fallthru
      _
    %749 = vsyncpa [#allocation3], 1
    %750 = vsyncpa [#allocation6], 1
    %751 = vsyncpa [#allocation4], 1

</llo_original>
